<compile_context>
chip_gen: v6e
topology: v6e:2x2x1
jax: 0.10.0
libtpu: 0.0.40
codegen_flags: <defaults>
</compile_context>

<pallas_src>
import functools

import jax
import jax.numpy as jnp
import numpy as np
from jax.experimental import pallas as pl
from jax.experimental.pallas import tpu as pltpu

# Packed row layout (channel-major):
#   rows  0..29 : pred channels  [x1,y1,w1,h1,c1, x2,y2,w2,h2,c2, 20 classes]
#   rows 30..33 : target box     [x, y, w, h]
#   rows 34..53 : target classes (20)
#   row  54     : has-object mask (0/1)
#   row  55     : zero padding (to a multiple of 8 sublanes)
_ROW_TBOX = 30
_ROW_TCLS = 34
_ROW_MASK = 54
_NUM_ROWS = 56


def _yolo_loss_kernel(x_ref, out_ref, acc_cls, acc_noobj, acc_reg, acc_conf,
                      *, inv_S):
    step = pl.program_id(0)

    @pl.when(step == 0)
    def _init():
        acc_cls[...] = jnp.zeros_like(acc_cls)
        acc_noobj[...] = jnp.zeros_like(acc_noobj)
        acc_reg[...] = jnp.zeros_like(acc_reg)
        acc_conf[...] = jnp.zeros_like(acc_conf)

    m = x_ref[_ROW_MASK]                                  # (R, 128), 0/1 mask

    # ---- class prediction loss: sum over 20 class channels of squared error.
    # Running-sum loop keeps the live set to a couple of vregs per channel;
    # this kernel is HBM-bound, so the serial add chain is not on the
    # critical path.
    cls_sq = None
    for c in range(20):
        d = x_ref[10 + c] - x_ref[_ROW_TCLS + c]
        sq = d * d
        cls_sq = sq if cls_sq is None else cls_sq + sq
    acc_cls[...] += m * cls_sq

    # ---- no-object loss: conf^2 of both predicted boxes on non-object cells
    conf1 = x_ref[4]
    conf2 = x_ref[9]
    acc_noobj[...] += (1.0 - m) * (conf1 * conf1 + conf2 * conf2)

    # ---- IoU of predicted box 1 vs target box (per cell).  The reference
    # converts box 1 twice, so best_iou is always box 1's IoU and best_boxes
    # is always predicted box 2.
    px, py, pw, ph = x_ref[0], x_ref[1], x_ref[2], x_ref[3]
    tx, ty = x_ref[_ROW_TBOX + 0], x_ref[_ROW_TBOX + 1]
    tw, th = x_ref[_ROW_TBOX + 2], x_ref[_ROW_TBOX + 3]

    p_x1 = px * inv_S - 0.5 * pw
    p_y1 = py * inv_S - 0.5 * ph
    p_x2 = px * inv_S + 0.5 * pw
    p_y2 = py * inv_S + 0.5 * ph
    t_x1 = tx * inv_S - 0.5 * tw
    t_y1 = ty * inv_S - 0.5 * th
    t_x2 = tx * inv_S + 0.5 * tw
    t_y2 = ty * inv_S + 0.5 * th

    iw = jnp.maximum(jnp.minimum(p_x2, t_x2) - jnp.maximum(p_x1, t_x1), 0.0)
    ih = jnp.maximum(jnp.minimum(p_y2, t_y2) - jnp.maximum(p_y1, t_y1), 0.0)
    inter = iw * ih
    area1 = (p_x2 - p_x1) * (p_y2 - p_y1)
    area2 = (t_x2 - t_x1) * (t_y2 - t_y1)
    # Clamp so all-zero padded cells (masked out below) cannot make 0/0 NaNs.
    # approx=False keeps full f32 precision (one reciprocal per tile is
    # negligible for this HBM-bound kernel).
    denom = jnp.maximum(area1 + area2 - inter, 1e-12)
    iou = inter * pl.reciprocal(denom, approx=False)

    # ---- regression (x, y of box 2) + containing-object confidence loss
    b2x, b2y, b2c = x_ref[5], x_ref[6], conf2
    dx = tx - b2x
    dy = ty - b2y
    acc_reg[...] += m * (dx * dx + dy * dy)
    dconf = b2c - iou
    acc_conf[...] += m * (dconf * dconf)

    # ---- single cross-lane reduction to 4 scalars, on the last step only
    @pl.when(step == pl.num_programs(0) - 1)
    def _finalize():
        out_ref[0] = jnp.sum(acc_cls[...])
        out_ref[1] = jnp.sum(acc_noobj[...])
        out_ref[2] = jnp.sum(acc_reg[...])
        out_ref[3] = jnp.sum(acc_conf[...])


def _round_up(x, m):
    return (x + m - 1) // m * m


@functools.partial(
    jax.jit,
    static_argnames=("S", "B", "l_coord", "l_noobj", "cells_per_tile"))
def yolo_loss(pred_tensor, target_boxes, target_cls, has_object_map,
              *, S, B=2, l_coord=5.0, l_noobj=0.5, cells_per_tile=8192):
    """Pallas implementation of YoloLoss.forward. Returns the same loss dict."""
    assert B == 2, "packed layout assumes B == 2 (5*B + 20 == 30 channels)"
    N = pred_tensor.shape[0]
    M = int(np.prod(pred_tensor.shape[:-1]))   # N * S * S cells
    f32 = jnp.float32

    pred2 = pred_tensor.reshape(M, 5 * B + 20).astype(f32)
    tbox2 = target_boxes.reshape(M, 4).astype(f32)
    tcls2 = target_cls.reshape(M, 20).astype(f32)
    mask2 = has_object_map.reshape(M, 1).astype(f32)
    pad_col = jnp.zeros((M, _NUM_ROWS - 55), f32)
    packed = jnp.concatenate([pred2, tbox2, tcls2, mask2, pad_col], axis=1)

    # Adaptive tile sizing: use big tiles (cells_per_tile) for large inputs,
    # but never tile bigger than the (8-row rounded) data itself so small
    # inputs are not padded up to a full large tile.  tile_rows is always a
    # multiple of 8 (sublane constraint) and divides m_pad/128 exactly.
    rows_total = -(-M // 128)
    max_rows = max(8, cells_per_tile // 128)
    tile_rows = min(max_rows, _round_up(rows_total, 8))
    cells = tile_rows * 128
    m_pad = _round_up(M, cells)
    if m_pad != M:
        # Padded cells are all-zero -> mask 0, conf 0 -> contribute nothing.
        packed = jnp.pad(packed, ((0, m_pad - M), (0, 0)))
    # Channel-major, lane-dense layout: (56, m_pad/128, 128).
    packed = packed.T.reshape(_NUM_ROWS, m_pad // 128, 128)
    grid = (m_pad // cells,)

    sums = pl.pallas_call(
        functools.partial(_yolo_loss_kernel, inv_S=1.0 / float(S)),
        out_shape=jax.ShapeDtypeStruct((4,), f32),
        grid=grid,
        in_specs=[pl.BlockSpec((_NUM_ROWS, tile_rows, 128),
                               lambda i: (0, i, 0))],
        out_specs=pl.BlockSpec(memory_space=pltpu.MemorySpace.SMEM),
        scratch_shapes=[pltpu.VMEM((tile_rows, 128), f32)] * 4,
        compiler_params=pltpu.CompilerParams(
            dimension_semantics=("arbitrary",)),
    )(packed)
    # TODO(synk): for very large M on v7x, add an outer "parallel" chunk axis
    # writing per-chunk partial sums (reduced in JAX) so both TensorCores
    # contribute; a single streaming TC already saturates HBM for this kernel.

    cls_loss = sums[0] / N
    no_obj_loss = l_noobj * sums[1] / N
    reg_loss = l_coord * sums[2] / N
    containing_obj_loss = sums[3] / N
    total_loss = cls_loss + no_obj_loss + reg_loss + containing_obj_loss
    return dict(total_loss=total_loss,
                reg_loss=reg_loss,
                containing_obj_loss=containing_obj_loss,
                no_obj_loss=no_obj_loss,
                cls_loss=cls_loss)


def _reference_loss(pred, tbox, tcls, mask, S, l_coord, l_noobj):
    """NumPy re-implementation following the PyTorch code path (with gathers)."""
    pred = np.asarray(pred, np.float32)
    tbox = np.asarray(tbox, np.float32)
    tcls = np.asarray(tcls, np.float32)
    mask = np.asarray(mask, bool)
    N = pred.shape[0]

    cls_loss = np.sum((pred[..., 10:][mask] - tcls[mask]) ** 2) / N
    conf1, conf2 = pred[..., 4], pred[..., 9]
    no_obj = l_noobj * np.sum((~mask) * (conf1 ** 2 + conf2 ** 2)) / N

    mflat = mask.reshape(-1)
    p1 = pred[..., :5].reshape(-1, 5)[mflat]
    p2 = pred[..., 5:10].reshape(-1, 5)[mflat]
    bt = tbox.reshape(-1, 4)[mflat]

    def xyxy(b):
        x, y, w, h = b[:, 0], b[:, 1], b[:, 2], b[:, 3]
        return np.stack([x / S - 0.5 * w, y / S - 0.5 * h,
                         x / S + 0.5 * w, y / S + 0.5 * h], 1)

    b1, btx = xyxy(p1[:, :4]), xyxy(bt)
    lt = np.maximum(b1[:, :2], btx[:, :2])
    rb = np.minimum(b1[:, 2:], btx[:, 2:])
    wh = np.clip(rb - lt, 0.0, None)
    inter = wh[:, 0] * wh[:, 1]
    a1 = (b1[:, 2] - b1[:, 0]) * (b1[:, 3] - b1[:, 1])
    a2 = (btx[:, 2] - btx[:, 0]) * (btx[:, 3] - btx[:, 1])
    iou = inter / (a1 + a2 - inter)

    best_boxes = p2  # box 2 always selected (strict > on equal IoUs)
    reg = l_coord * np.sum((bt[:, :2] - best_boxes[:, :2]) ** 2) / N
    conf = np.sum((best_boxes[:, 4] - iou) ** 2) / N
    return cls_loss + no_obj + reg + conf


if __name__ == "__main__":
    key = jax.random.PRNGKey(0)
    N, S, B, C = 2, 8, 2, 20
    l_coord, l_noobj = 5.0, 0.5
    k1, k2, k3, k4 = jax.random.split(key, 4)

    pred_tensor = jax.random.uniform(k1, (N, S, S, 5 * B + C), dtype=jnp.float32)
    target_boxes = jax.random.uniform(k2, (N, S, S, 4), dtype=jnp.float32)
    target_cls = jax.random.uniform(k3, (N, S, S, C), dtype=jnp.float32)
    has_object_map = jax.random.uniform(k4, (N, S, S)) > 0.5

    loss_dict = yolo_loss(pred_tensor, target_boxes, target_cls, has_object_map,
                          S=S, B=B, l_coord=l_coord, l_noobj=l_noobj)
    jax.block_until_ready(loss_dict["total_loss"])

    ref_total = _reference_loss(pred_tensor, target_boxes, target_cls,
                                has_object_map, S, l_coord, l_noobj)
    assert np.allclose(float(loss_dict["total_loss"]), ref_total,
                       rtol=1e-4, atol=1e-4), (float(loss_dict["total_loss"]),
                                               ref_total)

    print("KERNEL_OK")
</pallas_src>

<mosaic_0001>
module attributes {stable_mosaic.version = 11 : i64} {
  func.func @_yolo_loss_kernel(%arg0: i32, %arg1: memref<56x8x128xf32, #tpu.memory_space<vmem>>, %arg2: memref<4xf32, #tpu.memory_space<smem>>, %arg3: memref<8x128xf32, #tpu.memory_space<vmem>>, %arg4: memref<8x128xf32, #tpu.memory_space<vmem>>, %arg5: memref<8x128xf32, #tpu.memory_space<vmem>>, %arg6: memref<8x128xf32, #tpu.memory_space<vmem>>) attributes {dimension_semantics = [#tpu.dimension_semantics<arbitrary>], iteration_bounds = array<i64: 1>, scalar_prefetch = 0 : i64, scratch_operands = 4 : i64, tpu.core_type = #tpu.core_type<tc>, window_params = [{transform_indices = @transform_0, window_bounds = array<i64: 56, 8, 128>}, {transform_indices = @transform_1, window_bounds = array<i64: 4>}]} {
    %c0_i32 = arith.constant 0 : i32
    %0 = arith.cmpi eq, %arg0, %c0_i32 : i32
    %1 = arith.extui %0 : i1 to i32
    %c0_i32_0 = arith.constant 0 : i32
    %2 = arith.cmpi ne, %1, %c0_i32_0 : i32
    scf.if %2 {
      %cst_144 = arith.constant 0.000000e+00 : f32
      %262 = vector.broadcast %cst_144 : f32 to vector<8x128xf32>
      %c0_145 = arith.constant 0 : index
      %c0_146 = arith.constant 0 : index
      %263 = vector.load %arg3[%c0_145, %c0_146] : memref<8x128xf32, #tpu.memory_space<vmem>>, vector<8x128xf32>
      tpu.vector_store %arg3[%c0_145, %c0_146], %262 {strides = array<i32>} : memref<8x128xf32, #tpu.memory_space<vmem>>, vector<8x128xf32>,
      %cst_147 = arith.constant 0.000000e+00 : f32
      %264 = vector.broadcast %cst_147 : f32 to vector<8x128xf32>
      %c0_148 = arith.constant 0 : index
      %c0_149 = arith.constant 0 : index
      %265 = vector.load %arg4[%c0_148, %c0_149] : memref<8x128xf32, #tpu.memory_space<vmem>>, vector<8x128xf32>
      tpu.vector_store %arg4[%c0_148, %c0_149], %264 {strides = array<i32>} : memref<8x128xf32, #tpu.memory_space<vmem>>, vector<8x128xf32>,
      %cst_150 = arith.constant 0.000000e+00 : f32
      %266 = vector.broadcast %cst_150 : f32 to vector<8x128xf32>
      %c0_151 = arith.constant 0 : index
      %c0_152 = arith.constant 0 : index
      %267 = vector.load %arg5[%c0_151, %c0_152] : memref<8x128xf32, #tpu.memory_space<vmem>>, vector<8x128xf32>
      tpu.vector_store %arg5[%c0_151, %c0_152], %266 {strides = array<i32>} : memref<8x128xf32, #tpu.memory_space<vmem>>, vector<8x128xf32>,
      %cst_153 = arith.constant 0.000000e+00 : f32
      %268 = vector.broadcast %cst_153 : f32 to vector<8x128xf32>
      %c0_154 = arith.constant 0 : index
      %c0_155 = arith.constant 0 : index
      %269 = vector.load %arg6[%c0_154, %c0_155] : memref<8x128xf32, #tpu.memory_space<vmem>>, vector<8x128xf32>
      tpu.vector_store %arg6[%c0_154, %c0_155], %268 {strides = array<i32>} : memref<8x128xf32, #tpu.memory_space<vmem>>, vector<8x128xf32>,
    } else {
    }
    %c54 = arith.constant 54 : index
    %c0 = arith.constant 0 : index
    %c0_1 = arith.constant 0 : index
    %3 = vector.load %arg1[%c54, %c0, %c0_1] : memref<56x8x128xf32, #tpu.memory_space<vmem>>, vector<1x8x128xf32>
    %4 = vector.shape_cast %3 : vector<1x8x128xf32> to vector<8x128xf32>
    %c10 = arith.constant 10 : index
    %c0_2 = arith.constant 0 : index
    %c0_3 = arith.constant 0 : index
    %5 = vector.load %arg1[%c10, %c0_2, %c0_3] : memref<56x8x128xf32, #tpu.memory_space<vmem>>, vector<1x8x128xf32>
    %6 = vector.shape_cast %5 : vector<1x8x128xf32> to vector<8x128xf32>
    %c34 = arith.constant 34 : index
    %c0_4 = arith.constant 0 : index
    %c0_5 = arith.constant 0 : index
    %7 = vector.load %arg1[%c34, %c0_4, %c0_5] : memref<56x8x128xf32, #tpu.memory_space<vmem>>, vector<1x8x128xf32>
    %8 = vector.shape_cast %7 : vector<1x8x128xf32> to vector<8x128xf32>
    %9 = arith.subf %6, %8 : vector<8x128xf32>
    %10 = arith.mulf %9, %9 : vector<8x128xf32>
    %c11 = arith.constant 11 : index
    %c0_6 = arith.constant 0 : index
    %c0_7 = arith.constant 0 : index
    %11 = vector.load %arg1[%c11, %c0_6, %c0_7] : memref<56x8x128xf32, #tpu.memory_space<vmem>>, vector<1x8x128xf32>
    %12 = vector.shape_cast %11 : vector<1x8x128xf32> to vector<8x128xf32>
    %c35 = arith.constant 35 : index
    %c0_8 = arith.constant 0 : index
    %c0_9 = arith.constant 0 : index
    %13 = vector.load %arg1[%c35, %c0_8, %c0_9] : memref<56x8x128xf32, #tpu.memory_space<vmem>>, vector<1x8x128xf32>
    %14 = vector.shape_cast %13 : vector<1x8x128xf32> to vector<8x128xf32>
    %15 = arith.subf %12, %14 : vector<8x128xf32>
    %16 = arith.mulf %15, %15 : vector<8x128xf32>
    %17 = arith.addf %10, %16 : vector<8x128xf32>
    %c12 = arith.constant 12 : index
    %c0_10 = arith.constant 0 : index
    %c0_11 = arith.constant 0 : index
    %18 = vector.load %arg1[%c12, %c0_10, %c0_11] : memref<56x8x128xf32, #tpu.memory_space<vmem>>, vector<1x8x128xf32>
    %19 = vector.shape_cast %18 : vector<1x8x128xf32> to vector<8x128xf32>
    %c36 = arith.constant 36 : index
    %c0_12 = arith.constant 0 : index
    %c0_13 = arith.constant 0 : index
    %20 = vector.load %arg1[%c36, %c0_12, %c0_13] : memref<56x8x128xf32, #tpu.memory_space<vmem>>, vector<1x8x128xf32>
    %21 = vector.shape_cast %20 : vector<1x8x128xf32> to vector<8x128xf32>
    %22 = arith.subf %19, %21 : vector<8x128xf32>
    %23 = arith.mulf %22, %22 : vector<8x128xf32>
    %24 = arith.addf %17, %23 : vector<8x128xf32>
    %c13 = arith.constant 13 : index
    %c0_14 = arith.constant 0 : index
    %c0_15 = arith.constant 0 : index
    %25 = vector.load %arg1[%c13, %c0_14, %c0_15] : memref<56x8x128xf32, #tpu.memory_space<vmem>>, vector<1x8x128xf32>
    %26 = vector.shape_cast %25 : vector<1x8x128xf32> to vector<8x128xf32>
    %c37 = arith.constant 37 : index
    %c0_16 = arith.constant 0 : index
    %c0_17 = arith.constant 0 : index
    %27 = vector.load %arg1[%c37, %c0_16, %c0_17] : memref<56x8x128xf32, #tpu.memory_space<vmem>>, vector<1x8x128xf32>
    %28 = vector.shape_cast %27 : vector<1x8x128xf32> to vector<8x128xf32>
    %29 = arith.subf %26, %28 : vector<8x128xf32>
    %30 = arith.mulf %29, %29 : vector<8x128xf32>
    %31 = arith.addf %24, %30 : vector<8x128xf32>
    %c14 = arith.constant 14 : index
    %c0_18 = arith.constant 0 : index
    %c0_19 = arith.constant 0 : index
    %32 = vector.load %arg1[%c14, %c0_18, %c0_19] : memref<56x8x128xf32, #tpu.memory_space<vmem>>, vector<1x8x128xf32>
    %33 = vector.shape_cast %32 : vector<1x8x128xf32> to vector<8x128xf32>
    %c38 = arith.constant 38 : index
    %c0_20 = arith.constant 0 : index
    %c0_21 = arith.constant 0 : index
    %34 = vector.load %arg1[%c38, %c0_20, %c0_21] : memref<56x8x128xf32, #tpu.memory_space<vmem>>, vector<1x8x128xf32>
    %35 = vector.shape_cast %34 : vector<1x8x128xf32> to vector<8x128xf32>
    %36 = arith.subf %33, %35 : vector<8x128xf32>
    %37 = arith.mulf %36, %36 : vector<8x128xf32>
    %38 = arith.addf %31, %37 : vector<8x128xf32>
    %c15 = arith.constant 15 : index
    %c0_22 = arith.constant 0 : index
    %c0_23 = arith.constant 0 : index
    %39 = vector.load %arg1[%c15, %c0_22, %c0_23] : memref<56x8x128xf32, #tpu.memory_space<vmem>>, vector<1x8x128xf32>
    %40 = vector.shape_cast %39 : vector<1x8x128xf32> to vector<8x128xf32>
    %c39 = arith.constant 39 : index
    %c0_24 = arith.constant 0 : index
    %c0_25 = arith.constant 0 : index
    %41 = vector.load %arg1[%c39, %c0_24, %c0_25] : memref<56x8x128xf32, #tpu.memory_space<vmem>>, vector<1x8x128xf32>
    %42 = vector.shape_cast %41 : vector<1x8x128xf32> to vector<8x128xf32>
    %43 = arith.subf %40, %42 : vector<8x128xf32>
    %44 = arith.mulf %43, %43 : vector<8x128xf32>
    %45 = arith.addf %38, %44 : vector<8x128xf32>
    %c16 = arith.constant 16 : index
    %c0_26 = arith.constant 0 : index
    %c0_27 = arith.constant 0 : index
    %46 = vector.load %arg1[%c16, %c0_26, %c0_27] : memref<56x8x128xf32, #tpu.memory_space<vmem>>, vector<1x8x128xf32>
    %47 = vector.shape_cast %46 : vector<1x8x128xf32> to vector<8x128xf32>
    %c40 = arith.constant 40 : index
    %c0_28 = arith.constant 0 : index
    %c0_29 = arith.constant 0 : index
    %48 = vector.load %arg1[%c40, %c0_28, %c0_29] : memref<56x8x128xf32, #tpu.memory_space<vmem>>, vector<1x8x128xf32>
    %49 = vector.shape_cast %48 : vector<1x8x128xf32> to vector<8x128xf32>
    %50 = arith.subf %47, %49 : vector<8x128xf32>
    %51 = arith.mulf %50, %50 : vector<8x128xf32>
    %52 = arith.addf %45, %51 : vector<8x128xf32>
    %c17 = arith.constant 17 : index
    %c0_30 = arith.constant 0 : index
    %c0_31 = arith.constant 0 : index
    %53 = vector.load %arg1[%c17, %c0_30, %c0_31] : memref<56x8x128xf32, #tpu.memory_space<vmem>>, vector<1x8x128xf32>
    %54 = vector.shape_cast %53 : vector<1x8x128xf32> to vector<8x128xf32>
    %c41 = arith.constant 41 : index
    %c0_32 = arith.constant 0 : index
    %c0_33 = arith.constant 0 : index
    %55 = vector.load %arg1[%c41, %c0_32, %c0_33] : memref<56x8x128xf32, #tpu.memory_space<vmem>>, vector<1x8x128xf32>
    %56 = vector.shape_cast %55 : vector<1x8x128xf32> to vector<8x128xf32>
    %57 = arith.subf %54, %56 : vector<8x128xf32>
    %58 = arith.mulf %57, %57 : vector<8x128xf32>
    %59 = arith.addf %52, %58 : vector<8x128xf32>
    %c18 = arith.constant 18 : index
    %c0_34 = arith.constant 0 : index
    %c0_35 = arith.constant 0 : index
    %60 = vector.load %arg1[%c18, %c0_34, %c0_35] : memref<56x8x128xf32, #tpu.memory_space<vmem>>, vector<1x8x128xf32>
    %61 = vector.shape_cast %60 : vector<1x8x128xf32> to vector<8x128xf32>
    %c42 = arith.constant 42 : index
    %c0_36 = arith.constant 0 : index
    %c0_37 = arith.constant 0 : index
    %62 = vector.load %arg1[%c42, %c0_36, %c0_37] : memref<56x8x128xf32, #tpu.memory_space<vmem>>, vector<1x8x128xf32>
    %63 = vector.shape_cast %62 : vector<1x8x128xf32> to vector<8x128xf32>
    %64 = arith.subf %61, %63 : vector<8x128xf32>
    %65 = arith.mulf %64, %64 : vector<8x128xf32>
    %66 = arith.addf %59, %65 : vector<8x128xf32>
    %c19 = arith.constant 19 : index
    %c0_38 = arith.constant 0 : index
    %c0_39 = arith.constant 0 : index
    %67 = vector.load %arg1[%c19, %c0_38, %c0_39] : memref<56x8x128xf32, #tpu.memory_space<vmem>>, vector<1x8x128xf32>
    %68 = vector.shape_cast %67 : vector<1x8x128xf32> to vector<8x128xf32>
    %c43 = arith.constant 43 : index
    %c0_40 = arith.constant 0 : index
    %c0_41 = arith.constant 0 : index
    %69 = vector.load %arg1[%c43, %c0_40, %c0_41] : memref<56x8x128xf32, #tpu.memory_space<vmem>>, vector<1x8x128xf32>
    %70 = vector.shape_cast %69 : vector<1x8x128xf32> to vector<8x128xf32>
    %71 = arith.subf %68, %70 : vector<8x128xf32>
    %72 = arith.mulf %71, %71 : vector<8x128xf32>
    %73 = arith.addf %66, %72 : vector<8x128xf32>
    %c20 = arith.constant 20 : index
    %c0_42 = arith.constant 0 : index
    %c0_43 = arith.constant 0 : index
    %74 = vector.load %arg1[%c20, %c0_42, %c0_43] : memref<56x8x128xf32, #tpu.memory_space<vmem>>, vector<1x8x128xf32>
    %75 = vector.shape_cast %74 : vector<1x8x128xf32> to vector<8x128xf32>
    %c44 = arith.constant 44 : index
    %c0_44 = arith.constant 0 : index
    %c0_45 = arith.constant 0 : index
    %76 = vector.load %arg1[%c44, %c0_44, %c0_45] : memref<56x8x128xf32, #tpu.memory_space<vmem>>, vector<1x8x128xf32>
    %77 = vector.shape_cast %76 : vector<1x8x128xf32> to vector<8x128xf32>
    %78 = arith.subf %75, %77 : vector<8x128xf32>
    %79 = arith.mulf %78, %78 : vector<8x128xf32>
    %80 = arith.addf %73, %79 : vector<8x128xf32>
    %c21 = arith.constant 21 : index
    %c0_46 = arith.constant 0 : index
    %c0_47 = arith.constant 0 : index
    %81 = vector.load %arg1[%c21, %c0_46, %c0_47] : memref<56x8x128xf32, #tpu.memory_space<vmem>>, vector<1x8x128xf32>
    %82 = vector.shape_cast %81 : vector<1x8x128xf32> to vector<8x128xf32>
    %c45 = arith.constant 45 : index
    %c0_48 = arith.constant 0 : index
    %c0_49 = arith.constant 0 : index
    %83 = vector.load %arg1[%c45, %c0_48, %c0_49] : memref<56x8x128xf32, #tpu.memory_space<vmem>>, vector<1x8x128xf32>
    %84 = vector.shape_cast %83 : vector<1x8x128xf32> to vector<8x128xf32>
    %85 = arith.subf %82, %84 : vector<8x128xf32>
    %86 = arith.mulf %85, %85 : vector<8x128xf32>
    %87 = arith.addf %80, %86 : vector<8x128xf32>
    %c22 = arith.constant 22 : index
    %c0_50 = arith.constant 0 : index
    %c0_51 = arith.constant 0 : index
    %88 = vector.load %arg1[%c22, %c0_50, %c0_51] : memref<56x8x128xf32, #tpu.memory_space<vmem>>, vector<1x8x128xf32>
    %89 = vector.shape_cast %88 : vector<1x8x128xf32> to vector<8x128xf32>
    %c46 = arith.constant 46 : index
    %c0_52 = arith.constant 0 : index
    %c0_53 = arith.constant 0 : index
    %90 = vector.load %arg1[%c46, %c0_52, %c0_53] : memref<56x8x128xf32, #tpu.memory_space<vmem>>, vector<1x8x128xf32>
    %91 = vector.shape_cast %90 : vector<1x8x128xf32> to vector<8x128xf32>
    %92 = arith.subf %89, %91 : vector<8x128xf32>
    %93 = arith.mulf %92, %92 : vector<8x128xf32>
    %94 = arith.addf %87, %93 : vector<8x128xf32>
    %c23 = arith.constant 23 : index
    %c0_54 = arith.constant 0 : index
    %c0_55 = arith.constant 0 : index
    %95 = vector.load %arg1[%c23, %c0_54, %c0_55] : memref<56x8x128xf32, #tpu.memory_space<vmem>>, vector<1x8x128xf32>
    %96 = vector.shape_cast %95 : vector<1x8x128xf32> to vector<8x128xf32>
    %c47 = arith.constant 47 : index
    %c0_56 = arith.constant 0 : index
    %c0_57 = arith.constant 0 : index
    %97 = vector.load %arg1[%c47, %c0_56, %c0_57] : memref<56x8x128xf32, #tpu.memory_space<vmem>>, vector<1x8x128xf32>
    %98 = vector.shape_cast %97 : vector<1x8x128xf32> to vector<8x128xf32>
    %99 = arith.subf %96, %98 : vector<8x128xf32>
    %100 = arith.mulf %99, %99 : vector<8x128xf32>
    %101 = arith.addf %94, %100 : vector<8x128xf32>
    %c24 = arith.constant 24 : index
    %c0_58 = arith.constant 0 : index
    %c0_59 = arith.constant 0 : index
    %102 = vector.load %arg1[%c24, %c0_58, %c0_59] : memref<56x8x128xf32, #tpu.memory_space<vmem>>, vector<1x8x128xf32>
    %103 = vector.shape_cast %102 : vector<1x8x128xf32> to vector<8x128xf32>
    %c48 = arith.constant 48 : index
    %c0_60 = arith.constant 0 : index
    %c0_61 = arith.constant 0 : index
    %104 = vector.load %arg1[%c48, %c0_60, %c0_61] : memref<56x8x128xf32, #tpu.memory_space<vmem>>, vector<1x8x128xf32>
    %105 = vector.shape_cast %104 : vector<1x8x128xf32> to vector<8x128xf32>
    %106 = arith.subf %103, %105 : vector<8x128xf32>
    %107 = arith.mulf %106, %106 : vector<8x128xf32>
    %108 = arith.addf %101, %107 : vector<8x128xf32>
    %c25 = arith.constant 25 : index
    %c0_62 = arith.constant 0 : index
    %c0_63 = arith.constant 0 : index
    %109 = vector.load %arg1[%c25, %c0_62, %c0_63] : memref<56x8x128xf32, #tpu.memory_space<vmem>>, vector<1x8x128xf32>
    %110 = vector.shape_cast %109 : vector<1x8x128xf32> to vector<8x128xf32>
    %c49 = arith.constant 49 : index
    %c0_64 = arith.constant 0 : index
    %c0_65 = arith.constant 0 : index
    %111 = vector.load %arg1[%c49, %c0_64, %c0_65] : memref<56x8x128xf32, #tpu.memory_space<vmem>>, vector<1x8x128xf32>
    %112 = vector.shape_cast %111 : vector<1x8x128xf32> to vector<8x128xf32>
    %113 = arith.subf %110, %112 : vector<8x128xf32>
    %114 = arith.mulf %113, %113 : vector<8x128xf32>
    %115 = arith.addf %108, %114 : vector<8x128xf32>
    %c26 = arith.constant 26 : index
    %c0_66 = arith.constant 0 : index
    %c0_67 = arith.constant 0 : index
    %116 = vector.load %arg1[%c26, %c0_66, %c0_67] : memref<56x8x128xf32, #tpu.memory_space<vmem>>, vector<1x8x128xf32>
    %117 = vector.shape_cast %116 : vector<1x8x128xf32> to vector<8x128xf32>
    %c50 = arith.constant 50 : index
    %c0_68 = arith.constant 0 : index
    %c0_69 = arith.constant 0 : index
    %118 = vector.load %arg1[%c50, %c0_68, %c0_69] : memref<56x8x128xf32, #tpu.memory_space<vmem>>, vector<1x8x128xf32>
    %119 = vector.shape_cast %118 : vector<1x8x128xf32> to vector<8x128xf32>
    %120 = arith.subf %117, %119 : vector<8x128xf32>
    %121 = arith.mulf %120, %120 : vector<8x128xf32>
    %122 = arith.addf %115, %121 : vector<8x128xf32>
    %c27 = arith.constant 27 : index
    %c0_70 = arith.constant 0 : index
    %c0_71 = arith.constant 0 : index
    %123 = vector.load %arg1[%c27, %c0_70, %c0_71] : memref<56x8x128xf32, #tpu.memory_space<vmem>>, vector<1x8x128xf32>
    %124 = vector.shape_cast %123 : vector<1x8x128xf32> to vector<8x128xf32>
    %c51 = arith.constant 51 : index
    %c0_72 = arith.constant 0 : index
    %c0_73 = arith.constant 0 : index
    %125 = vector.load %arg1[%c51, %c0_72, %c0_73] : memref<56x8x128xf32, #tpu.memory_space<vmem>>, vector<1x8x128xf32>
    %126 = vector.shape_cast %125 : vector<1x8x128xf32> to vector<8x128xf32>
    %127 = arith.subf %124, %126 : vector<8x128xf32>
    %128 = arith.mulf %127, %127 : vector<8x128xf32>
    %129 = arith.addf %122, %128 : vector<8x128xf32>
    %c28 = arith.constant 28 : index
    %c0_74 = arith.constant 0 : index
    %c0_75 = arith.constant 0 : index
    %130 = vector.load %arg1[%c28, %c0_74, %c0_75] : memref<56x8x128xf32, #tpu.memory_space<vmem>>, vector<1x8x128xf32>
    %131 = vector.shape_cast %130 : vector<1x8x128xf32> to vector<8x128xf32>
    %c52 = arith.constant 52 : index
    %c0_76 = arith.constant 0 : index
    %c0_77 = arith.constant 0 : index
    %132 = vector.load %arg1[%c52, %c0_76, %c0_77] : memref<56x8x128xf32, #tpu.memory_space<vmem>>, vector<1x8x128xf32>
    %133 = vector.shape_cast %132 : vector<1x8x128xf32> to vector<8x128xf32>
    %134 = arith.subf %131, %133 : vector<8x128xf32>
    %135 = arith.mulf %134, %134 : vector<8x128xf32>
    %136 = arith.addf %129, %135 : vector<8x128xf32>
    %c29 = arith.constant 29 : index
    %c0_78 = arith.constant 0 : index
    %c0_79 = arith.constant 0 : index
    %137 = vector.load %arg1[%c29, %c0_78, %c0_79] : memref<56x8x128xf32, #tpu.memory_space<vmem>>, vector<1x8x128xf32>
    %138 = vector.shape_cast %137 : vector<1x8x128xf32> to vector<8x128xf32>
    %c53 = arith.constant 53 : index
    %c0_80 = arith.constant 0 : index
    %c0_81 = arith.constant 0 : index
    %139 = vector.load %arg1[%c53, %c0_80, %c0_81] : memref<56x8x128xf32, #tpu.memory_space<vmem>>, vector<1x8x128xf32>
    %140 = vector.shape_cast %139 : vector<1x8x128xf32> to vector<8x128xf32>
    %141 = arith.subf %138, %140 : vector<8x128xf32>
    %142 = arith.mulf %141, %141 : vector<8x128xf32>
    %143 = arith.addf %136, %142 : vector<8x128xf32>
    %c0_82 = arith.constant 0 : index
    %c0_83 = arith.constant 0 : index
    %144 = vector.load %arg3[%c0_82, %c0_83] : memref<8x128xf32, #tpu.memory_space<vmem>>, vector<8x128xf32>
    %145 = arith.mulf %4, %143 : vector<8x128xf32>
    %146 = arith.addf %144, %145 : vector<8x128xf32>
    %c0_84 = arith.constant 0 : index
    %c0_85 = arith.constant 0 : index
    %147 = vector.load %arg3[%c0_84, %c0_85] : memref<8x128xf32, #tpu.memory_space<vmem>>, vector<8x128xf32>
    tpu.vector_store %arg3[%c0_84, %c0_85], %146 {strides = array<i32>} : memref<8x128xf32, #tpu.memory_space<vmem>>, vector<8x128xf32>,
    %c4 = arith.constant 4 : index
    %c0_86 = arith.constant 0 : index
    %c0_87 = arith.constant 0 : index
    %148 = vector.load %arg1[%c4, %c0_86, %c0_87] : memref<56x8x128xf32, #tpu.memory_space<vmem>>, vector<1x8x128xf32>
    %149 = vector.shape_cast %148 : vector<1x8x128xf32> to vector<8x128xf32>
    %c9 = arith.constant 9 : index
    %c0_88 = arith.constant 0 : index
    %c0_89 = arith.constant 0 : index
    %150 = vector.load %arg1[%c9, %c0_88, %c0_89] : memref<56x8x128xf32, #tpu.memory_space<vmem>>, vector<1x8x128xf32>
    %151 = vector.shape_cast %150 : vector<1x8x128xf32> to vector<8x128xf32>
    %c0_90 = arith.constant 0 : index
    %c0_91 = arith.constant 0 : index
    %152 = vector.load %arg4[%c0_90, %c0_91] : memref<8x128xf32, #tpu.memory_space<vmem>>, vector<8x128xf32>
    %cst = arith.constant 1.000000e+00 : f32
    %153 = vector.broadcast %cst : f32 to vector<8x128xf32>
    %154 = arith.subf %153, %4 : vector<8x128xf32>
    %155 = arith.mulf %149, %149 : vector<8x128xf32>
    %156 = arith.mulf %151, %151 : vector<8x128xf32>
    %157 = arith.addf %155, %156 : vector<8x128xf32>
    %158 = arith.mulf %154, %157 : vector<8x128xf32>
    %159 = arith.addf %152, %158 : vector<8x128xf32>
    %c0_92 = arith.constant 0 : index
    %c0_93 = arith.constant 0 : index
    %160 = vector.load %arg4[%c0_92, %c0_93] : memref<8x128xf32, #tpu.memory_space<vmem>>, vector<8x128xf32>
    tpu.vector_store %arg4[%c0_92, %c0_93], %159 {strides = array<i32>} : memref<8x128xf32, #tpu.memory_space<vmem>>, vector<8x128xf32>,
    %c0_94 = arith.constant 0 : index
    %c0_95 = arith.constant 0 : index
    %c0_96 = arith.constant 0 : index
    %161 = vector.load %arg1[%c0_94, %c0_95, %c0_96] : memref<56x8x128xf32, #tpu.memory_space<vmem>>, vector<1x8x128xf32>
    %162 = vector.shape_cast %161 : vector<1x8x128xf32> to vector<8x128xf32>
    %c1 = arith.constant 1 : index
    %c0_97 = arith.constant 0 : index
    %c0_98 = arith.constant 0 : index
    %163 = vector.load %arg1[%c1, %c0_97, %c0_98] : memref<56x8x128xf32, #tpu.memory_space<vmem>>, vector<1x8x128xf32>
    %164 = vector.shape_cast %163 : vector<1x8x128xf32> to vector<8x128xf32>
    %c2 = arith.constant 2 : index
    %c0_99 = arith.constant 0 : index
    %c0_100 = arith.constant 0 : index
    %165 = vector.load %arg1[%c2, %c0_99, %c0_100] : memref<56x8x128xf32, #tpu.memory_space<vmem>>, vector<1x8x128xf32>
    %166 = vector.shape_cast %165 : vector<1x8x128xf32> to vector<8x128xf32>
    %c3 = arith.constant 3 : index
    %c0_101 = arith.constant 0 : index
    %c0_102 = arith.constant 0 : index
    %167 = vector.load %arg1[%c3, %c0_101, %c0_102] : memref<56x8x128xf32, #tpu.memory_space<vmem>>, vector<1x8x128xf32>
    %168 = vector.shape_cast %167 : vector<1x8x128xf32> to vector<8x128xf32>
    %c30 = arith.constant 30 : index
    %c0_103 = arith.constant 0 : index
    %c0_104 = arith.constant 0 : index
    %169 = vector.load %arg1[%c30, %c0_103, %c0_104] : memref<56x8x128xf32, #tpu.memory_space<vmem>>, vector<1x8x128xf32>
    %170 = vector.shape_cast %169 : vector<1x8x128xf32> to vector<8x128xf32>
    %c31 = arith.constant 31 : index
    %c0_105 = arith.constant 0 : index
    %c0_106 = arith.constant 0 : index
    %171 = vector.load %arg1[%c31, %c0_105, %c0_106] : memref<56x8x128xf32, #tpu.memory_space<vmem>>, vector<1x8x128xf32>
    %172 = vector.shape_cast %171 : vector<1x8x128xf32> to vector<8x128xf32>
    %c32 = arith.constant 32 : index
    %c0_107 = arith.constant 0 : index
    %c0_108 = arith.constant 0 : index
    %173 = vector.load %arg1[%c32, %c0_107, %c0_108] : memref<56x8x128xf32, #tpu.memory_space<vmem>>, vector<1x8x128xf32>
    %174 = vector.shape_cast %173 : vector<1x8x128xf32> to vector<8x128xf32>
    %c33 = arith.constant 33 : index
    %c0_109 = arith.constant 0 : index
    %c0_110 = arith.constant 0 : index
    %175 = vector.load %arg1[%c33, %c0_109, %c0_110] : memref<56x8x128xf32, #tpu.memory_space<vmem>>, vector<1x8x128xf32>
    %176 = vector.shape_cast %175 : vector<1x8x128xf32> to vector<8x128xf32>
    %cst_111 = arith.constant 1.250000e-01 : f32
    %177 = vector.broadcast %cst_111 : f32 to vector<8x128xf32>
    %178 = arith.mulf %162, %177 : vector<8x128xf32>
    %cst_112 = arith.constant 5.000000e-01 : f32
    %179 = vector.broadcast %cst_112 : f32 to vector<8x128xf32>
    %180 = arith.mulf %179, %166 : vector<8x128xf32>
    %181 = arith.subf %178, %180 : vector<8x128xf32>
    %cst_113 = arith.constant 1.250000e-01 : f32
    %182 = vector.broadcast %cst_113 : f32 to vector<8x128xf32>
    %183 = arith.mulf %164, %182 : vector<8x128xf32>
    %cst_114 = arith.constant 5.000000e-01 : f32
    %184 = vector.broadcast %cst_114 : f32 to vector<8x128xf32>
    %185 = arith.mulf %184, %168 : vector<8x128xf32>
    %186 = arith.subf %183, %185 : vector<8x128xf32>
    %cst_115 = arith.constant 1.250000e-01 : f32
    %187 = vector.broadcast %cst_115 : f32 to vector<8x128xf32>
    %188 = arith.mulf %162, %187 : vector<8x128xf32>
    %cst_116 = arith.constant 5.000000e-01 : f32
    %189 = vector.broadcast %cst_116 : f32 to vector<8x128xf32>
    %190 = arith.mulf %189, %166 : vector<8x128xf32>
    %191 = arith.addf %188, %190 : vector<8x128xf32>
    %cst_117 = arith.constant 1.250000e-01 : f32
    %192 = vector.broadcast %cst_117 : f32 to vector<8x128xf32>
    %193 = arith.mulf %164, %192 : vector<8x128xf32>
    %cst_118 = arith.constant 5.000000e-01 : f32
    %194 = vector.broadcast %cst_118 : f32 to vector<8x128xf32>
    %195 = arith.mulf %194, %168 : vector<8x128xf32>
    %196 = arith.addf %193, %195 : vector<8x128xf32>
    %cst_119 = arith.constant 1.250000e-01 : f32
    %197 = vector.broadcast %cst_119 : f32 to vector<8x128xf32>
    %198 = arith.mulf %170, %197 : vector<8x128xf32>
    %cst_120 = arith.constant 5.000000e-01 : f32
    %199 = vector.broadcast %cst_120 : f32 to vector<8x128xf32>
    %200 = arith.mulf %199, %174 : vector<8x128xf32>
    %201 = arith.subf %198, %200 : vector<8x128xf32>
    %cst_121 = arith.constant 1.250000e-01 : f32
    %202 = vector.broadcast %cst_121 : f32 to vector<8x128xf32>
    %203 = arith.mulf %172, %202 : vector<8x128xf32>
    %cst_122 = arith.constant 5.000000e-01 : f32
    %204 = vector.broadcast %cst_122 : f32 to vector<8x128xf32>
    %205 = arith.mulf %204, %176 : vector<8x128xf32>
    %206 = arith.subf %203, %205 : vector<8x128xf32>
    %cst_123 = arith.constant 1.250000e-01 : f32
    %207 = vector.broadcast %cst_123 : f32 to vector<8x128xf32>
    %208 = arith.mulf %170, %207 : vector<8x128xf32>
    %cst_124 = arith.constant 5.000000e-01 : f32
    %209 = vector.broadcast %cst_124 : f32 to vector<8x128xf32>
    %210 = arith.mulf %209, %174 : vector<8x128xf32>
    %211 = arith.addf %208, %210 : vector<8x128xf32>
    %cst_125 = arith.constant 1.250000e-01 : f32
    %212 = vector.broadcast %cst_125 : f32 to vector<8x128xf32>
    %213 = arith.mulf %172, %212 : vector<8x128xf32>
    %cst_126 = arith.constant 5.000000e-01 : f32
    %214 = vector.broadcast %cst_126 : f32 to vector<8x128xf32>
    %215 = arith.mulf %214, %176 : vector<8x128xf32>
    %216 = arith.addf %213, %215 : vector<8x128xf32>
    %217 = arith.minimumf %191, %211 : vector<8x128xf32>
    %218 = arith.maximumf %181, %201 : vector<8x128xf32>
    %219 = arith.subf %217, %218 : vector<8x128xf32>
    %cst_127 = arith.constant 0.000000e+00 : f32
    %220 = vector.broadcast %cst_127 : f32 to vector<8x128xf32>
    %221 = arith.maximumf %219, %220 : vector<8x128xf32>
    %222 = arith.minimumf %196, %216 : vector<8x128xf32>
    %223 = arith.maximumf %186, %206 : vector<8x128xf32>
    %224 = arith.subf %222, %223 : vector<8x128xf32>
    %cst_128 = arith.constant 0.000000e+00 : f32
    %225 = vector.broadcast %cst_128 : f32 to vector<8x128xf32>
    %226 = arith.maximumf %224, %225 : vector<8x128xf32>
    %227 = arith.mulf %221, %226 : vector<8x128xf32>
    %228 = arith.subf %191, %181 : vector<8x128xf32>
    %229 = arith.subf %196, %186 : vector<8x128xf32>
    %230 = arith.mulf %228, %229 : vector<8x128xf32>
    %231 = arith.subf %211, %201 : vector<8x128xf32>
    %232 = arith.subf %216, %206 : vector<8x128xf32>
    %233 = arith.mulf %231, %232 : vector<8x128xf32>
    %234 = arith.addf %230, %233 : vector<8x128xf32>
    %235 = arith.subf %234, %227 : vector<8x128xf32>
    %cst_129 = arith.constant 9.99999996E-13 : f32
    %236 = vector.broadcast %cst_129 : f32 to vector<8x128xf32>
    %237 = arith.maximumf %235, %236 : vector<8x128xf32>
    %238 = tpu.reciprocal %237 : vector<8x128xf32> -> vector<8x128xf32>
    %239 = arith.mulf %227, %238 : vector<8x128xf32>
    %c5 = arith.constant 5 : index
    %c0_130 = arith.constant 0 : index
    %c0_131 = arith.constant 0 : index
    %240 = vector.load %arg1[%c5, %c0_130, %c0_131] : memref<56x8x128xf32, #tpu.memory_space<vmem>>, vector<1x8x128xf32>
    %241 = vector.shape_cast %240 : vector<1x8x128xf32> to vector<8x128xf32>
    %c6 = arith.constant 6 : index
    %c0_132 = arith.constant 0 : index
    %c0_133 = arith.constant 0 : index
    %242 = vector.load %arg1[%c6, %c0_132, %c0_133] : memref<56x8x128xf32, #tpu.memory_space<vmem>>, vector<1x8x128xf32>
    %243 = vector.shape_cast %242 : vector<1x8x128xf32> to vector<8x128xf32>
    %244 = arith.subf %170, %241 : vector<8x128xf32>
    %245 = arith.subf %172, %243 : vector<8x128xf32>
    %c0_134 = arith.constant 0 : index
    %c0_135 = arith.constant 0 : index
    %246 = vector.load %arg5[%c0_134, %c0_135] : memref<8x128xf32, #tpu.memory_space<vmem>>, vector<8x128xf32>
    %247 = arith.mulf %244, %244 : vector<8x128xf32>
    %248 = arith.mulf %245, %245 : vector<8x128xf32>
    %249 = arith.addf %247, %248 : vector<8x128xf32>
    %250 = arith.mulf %4, %249 : vector<8x128xf32>
    %251 = arith.addf %246, %250 : vector<8x128xf32>
    %c0_136 = arith.constant 0 : index
    %c0_137 = arith.constant 0 : index
    %252 = vector.load %arg5[%c0_136, %c0_137] : memref<8x128xf32, #tpu.memory_space<vmem>>, vector<8x128xf32>
    tpu.vector_store %arg5[%c0_136, %c0_137], %251 {strides = array<i32>} : memref<8x128xf32, #tpu.memory_space<vmem>>, vector<8x128xf32>,
    %253 = arith.subf %151, %239 : vector<8x128xf32>
    %c0_138 = arith.constant 0 : index
    %c0_139 = arith.constant 0 : index
    %254 = vector.load %arg6[%c0_138, %c0_139] : memref<8x128xf32, #tpu.memory_space<vmem>>, vector<8x128xf32>
    %255 = arith.mulf %253, %253 : vector<8x128xf32>
    %256 = arith.mulf %4, %255 : vector<8x128xf32>
    %257 = arith.addf %254, %256 : vector<8x128xf32>
    %c0_140 = arith.constant 0 : index
    %c0_141 = arith.constant 0 : index
    %258 = vector.load %arg6[%c0_140, %c0_141] : memref<8x128xf32, #tpu.memory_space<vmem>>, vector<8x128xf32>
    tpu.vector_store %arg6[%c0_140, %c0_141], %257 {strides = array<i32>} : memref<8x128xf32, #tpu.memory_space<vmem>>, vector<8x128xf32>,
    %c0_i32_142 = arith.constant 0 : i32
    %259 = arith.cmpi eq, %arg0, %c0_i32_142 : i32
    %260 = arith.extui %259 : i1 to i32
    %c0_i32_143 = arith.constant 0 : i32
    %261 = arith.cmpi ne, %260, %c0_i32_143 : i32
    scf.if %261 {
      %c0_144 = arith.constant 0 : index
      %c0_145 = arith.constant 0 : index
      %262 = vector.load %arg3[%c0_144, %c0_145] : memref<8x128xf32, #tpu.memory_space<vmem>>, vector<8x128xf32>
      %263 = vector.shape_cast %262 : vector<8x128xf32> to vector<1x8x128xf32>
      %cst_146 = arith.constant dense<0.000000e+00> : vector<1xf32>
      %264 = vector.multi_reduction <add>, %263, %cst_146 [1, 2] : vector<1x8x128xf32> to vector<1xf32>
      %265 = vector.shape_cast %264 : vector<1xf32> to vector<1x1x1xf32>
      %266 = vector.extract %265[0, 0, 0] : f32 from vector<1x1x1xf32>
      %c0_147 = arith.constant 0 : index
      %267 = memref.load %arg2[%c0_147] : memref<4xf32, #tpu.memory_space<smem>>
      memref.store %266, %arg2[%c0_147] : memref<4xf32, #tpu.memory_space<smem>>
      %c0_148 = arith.constant 0 : index
      %c0_149 = arith.constant 0 : index
      %268 = vector.load %arg4[%c0_148, %c0_149] : memref<8x128xf32, #tpu.memory_space<vmem>>, vector<8x128xf32>
      %269 = vector.shape_cast %268 : vector<8x128xf32> to vector<1x8x128xf32>
      %cst_150 = arith.constant dense<0.000000e+00> : vector<1xf32>
      %270 = vector.multi_reduction <add>, %269, %cst_150 [1, 2] : vector<1x8x128xf32> to vector<1xf32>
      %271 = vector.shape_cast %270 : vector<1xf32> to vector<1x1x1xf32>
      %272 = vector.extract %271[0, 0, 0] : f32 from vector<1x1x1xf32>
      %c1_151 = arith.constant 1 : index
      %273 = memref.load %arg2[%c1_151] : memref<4xf32, #tpu.memory_space<smem>>
      memref.store %272, %arg2[%c1_151] : memref<4xf32, #tpu.memory_space<smem>>
      %c0_152 = arith.constant 0 : index
      %c0_153 = arith.constant 0 : index
      %274 = vector.load %arg5[%c0_152, %c0_153] : memref<8x128xf32, #tpu.memory_space<vmem>>, vector<8x128xf32>
      %275 = vector.shape_cast %274 : vector<8x128xf32> to vector<1x8x128xf32>
      %cst_154 = arith.constant dense<0.000000e+00> : vector<1xf32>
      %276 = vector.multi_reduction <add>, %275, %cst_154 [1, 2] : vector<1x8x128xf32> to vector<1xf32>
      %277 = vector.shape_cast %276 : vector<1xf32> to vector<1x1x1xf32>
      %278 = vector.extract %277[0, 0, 0] : f32 from vector<1x1x1xf32>
      %c2_155 = arith.constant 2 : index
      %279 = memref.load %arg2[%c2_155] : memref<4xf32, #tpu.memory_space<smem>>
      memref.store %278, %arg2[%c2_155] : memref<4xf32, #tpu.memory_space<smem>>
      %c0_156 = arith.constant 0 : index
      %c0_157 = arith.constant 0 : index
      %280 = vector.load %arg6[%c0_156, %c0_157] : memref<8x128xf32, #tpu.memory_space<vmem>>, vector<8x128xf32>
      %281 = vector.shape_cast %280 : vector<8x128xf32> to vector<1x8x128xf32>
      %cst_158 = arith.constant dense<0.000000e+00> : vector<1xf32>
      %282 = vector.multi_reduction <add>, %281, %cst_158 [1, 2] : vector<1x8x128xf32> to vector<1xf32>
      %283 = vector.shape_cast %282 : vector<1xf32> to vector<1x1x1xf32>
      %284 = vector.extract %283[0, 0, 0] : f32 from vector<1x1x1xf32>
      %c3_159 = arith.constant 3 : index
      %285 = memref.load %arg2[%c3_159] : memref<4xf32, #tpu.memory_space<smem>>
      memref.store %284, %arg2[%c3_159] : memref<4xf32, #tpu.memory_space<smem>>
    } else {
    }
    return
  }
  func.func @transform_0(%arg0: i32) -> (i32, i32, i32) {
    %c0_i32 = arith.constant 0 : i32
    %c0_i32_0 = arith.constant 0 : i32
    %c0_i32_1 = arith.constant 0 : i32
    return %c0_i32, %arg0, %c0_i32_0 : i32, i32, i32
  }
  func.func @transform_1(%arg0: i32) -> i32 {
    %c0_i32 = arith.constant 0 : i32
    %c0_i32_0 = arith.constant 0 : i32
    return %c0_i32 : i32
  }
}

</mosaic_0001>

<llo_original>
// kernel: yolo_loss.1
$region0: #{yolo_loss.1}
  #allocation0 [shape = 'u32[]', space=smem, size = 0x4, offset = 0x4, fixed_abs, tag = 'smem constant byte address 0x4 - core index']
  #allocation1 [shape = 'u32[144,128]{1,0:T(1,128)}', space=vmem, size = 0x12000, scoped, tag = 'internal scratch']
  #allocation2 [shape = 'f32[8,128]{1,0:T(8,128)}', space=vmem, size = 0x1000, scoped, tag = 'scratch operand']
  #allocation3 [shape = 'f32[8,128]{1,0:T(8,128)}', space=vmem, size = 0x1000, scoped, tag = 'scratch operand']
  #allocation4 [shape = 'f32[8,128]{1,0:T(8,128)}', space=vmem, size = 0x1000, scoped, tag = 'scratch operand']
  #allocation5 [shape = 'f32[8,128]{1,0:T(8,128)}', space=vmem, size = 0x1000, scoped, tag = 'scratch operand']
  %s0 = inlined_call_operand.vmem [shape: f32[56,8,128], index: 0, kind: input, shape index: {}]
  %s1 = inlined_call_operand.vmem [shape: f32[4], index: 1, kind: output, shape index: {}]
  %s2 = sld [smem:[#allocation0]]
  $region22: #{yolo_loss.1} parent=0
    _
  %s4 = ssub.s32 1, %s2
  %s5 = scalar_select 0, %s4, %s2
  $region1: #{yolo_loss.1} parent=0
    #allocation6 [shape = 'u8[512]{0}', space=smem, size = 0x200, scoped, tag = 'output window, operand 0, single buffered']
    #allocation7 [shape = 's32[1]{0}', space=sflag, size = 0x4, scoped, tag = 'scoped memory for yolo_loss.1']
    %6 = vsyncpa [#allocation7], 0
    // Predicated region
    $region2: #{yolo_loss.1} parent=1 // pred_check
      _
    $region3: #{yolo_loss.1} parent=1 // pred_check_branch
      %8 = sbr.rel (0) target = $region5
    $region4: #{yolo_loss.1} parent=1 // pred_region
      _
    $region5: #{yolo_loss.1} parent=1 // pred_fallthru
      _
    %p9 = scmp.eq.s32.totalorder 0, 0
    // Predicated region
    $region6: #{yolo_loss.1} parent=1 // pred_check
      %p10 = pneg %p9
    $region7: #{yolo_loss.1} parent=1 // pred_check_branch
      %12 = sbr.rel (%p10) target = $region9
    $region8: #{yolo_loss.1} parent=1 // pred_region
      %13 = vst [vmem:[#allocation2] sm:$0xff] 0.0
      %14 = vst [vmem:[#allocation3] sm:$0xff] 0.0
      %15 = vst [vmem:[#allocation4] sm:$0xff] 0.0
      %16 = vst [vmem:[#allocation5] sm:$0xff] 0.0
    $region9: #{yolo_loss.1} parent=1 // pred_fallthru
      _
    %s17 = scalar_lea.vmem %s0, 432
    %v18 = vld [vmem:[%s17] sm:$0xff]
    %s19 = scalar_lea.vmem %s0, 80
    %v20 = vld [vmem:[%s19] sm:$0xff]
    %s21 = scalar_lea.vmem %s0, 272
    %v22 = vld [vmem:[%s21] sm:$0xff]
    %v23 = vsub.f32 %v20, %v22
    %v24 = vmul.f32 %v23, %v23
    %s25 = scalar_lea.vmem %s0, 88
    %v26 = vld [vmem:[%s25] sm:$0xff]
    %s27 = scalar_lea.vmem %s0, 280
    %v28 = vld [vmem:[%s27] sm:$0xff]
    %v29 = vsub.f32 %v26, %v28
    %v30 = vmul.f32 %v29, %v29
    %v31 = vadd.f32 %v24, %v30
    %s32 = scalar_lea.vmem %s0, 96
    %v33 = vld [vmem:[%s32] sm:$0xff]
    %s34 = scalar_lea.vmem %s0, 288
    %v35 = vld [vmem:[%s34] sm:$0xff]
    %v36 = vsub.f32 %v33, %v35
    %v37 = vmul.f32 %v36, %v36
    %v38 = vadd.f32 %v31, %v37
    %s39 = scalar_lea.vmem %s0, 104
    %v40 = vld [vmem:[%s39] sm:$0xff]
    %s41 = scalar_lea.vmem %s0, 296
    %v42 = vld [vmem:[%s41] sm:$0xff]
    %v43 = vsub.f32 %v40, %v42
    %v44 = vmul.f32 %v43, %v43
    %v45 = vadd.f32 %v38, %v44
    %s46 = scalar_lea.vmem %s0, 112
    %v47 = vld [vmem:[%s46] sm:$0xff]
    %s48 = scalar_lea.vmem %s0, 304
    %v49 = vld [vmem:[%s48] sm:$0xff]
    %v50 = vsub.f32 %v47, %v49
    %v51 = vmul.f32 %v50, %v50
    %v52 = vadd.f32 %v45, %v51
    %s53 = scalar_lea.vmem %s0, 120
    %v54 = vld [vmem:[%s53] sm:$0xff]
    %s55 = scalar_lea.vmem %s0, 312
    %v56 = vld [vmem:[%s55] sm:$0xff]
    %v57 = vsub.f32 %v54, %v56
    %v58 = vmul.f32 %v57, %v57
    %v59 = vadd.f32 %v52, %v58
    %s60 = scalar_lea.vmem %s0, 128
    %v61 = vld [vmem:[%s60] sm:$0xff]
    %s62 = scalar_lea.vmem %s0, 320
    %v63 = vld [vmem:[%s62] sm:$0xff]
    %v64 = vsub.f32 %v61, %v63
    %v65 = vmul.f32 %v64, %v64
    %v66 = vadd.f32 %v59, %v65
    %s67 = scalar_lea.vmem %s0, 136
    %v68 = vld [vmem:[%s67] sm:$0xff]
    %s69 = scalar_lea.vmem %s0, 328
    %v70 = vld [vmem:[%s69] sm:$0xff]
    %v71 = vsub.f32 %v68, %v70
    %v72 = vmul.f32 %v71, %v71
    %v73 = vadd.f32 %v66, %v72
    %s74 = scalar_lea.vmem %s0, 144
    %v75 = vld [vmem:[%s74] sm:$0xff]
    %s76 = scalar_lea.vmem %s0, 336
    %v77 = vld [vmem:[%s76] sm:$0xff]
    %v78 = vsub.f32 %v75, %v77
    %v79 = vmul.f32 %v78, %v78
    %v80 = vadd.f32 %v73, %v79
    %s81 = scalar_lea.vmem %s0, 152
    %v82 = vld [vmem:[%s81] sm:$0xff]
    %s83 = scalar_lea.vmem %s0, 344
    %v84 = vld [vmem:[%s83] sm:$0xff]
    %v85 = vsub.f32 %v82, %v84
    %v86 = vmul.f32 %v85, %v85
    %v87 = vadd.f32 %v80, %v86
    %s88 = scalar_lea.vmem %s0, 160
    %v89 = vld [vmem:[%s88] sm:$0xff]
    %s90 = scalar_lea.vmem %s0, 352
    %v91 = vld [vmem:[%s90] sm:$0xff]
    %v92 = vsub.f32 %v89, %v91
    %v93 = vmul.f32 %v92, %v92
    %v94 = vadd.f32 %v87, %v93
    %s95 = scalar_lea.vmem %s0, 168
    %v96 = vld [vmem:[%s95] sm:$0xff]
    %s97 = scalar_lea.vmem %s0, 360
    %v98 = vld [vmem:[%s97] sm:$0xff]
    %v99 = vsub.f32 %v96, %v98
    %v100 = vmul.f32 %v99, %v99
    %v101 = vadd.f32 %v94, %v100
    %s102 = scalar_lea.vmem %s0, 176
    %v103 = vld [vmem:[%s102] sm:$0xff]
    %s104 = scalar_lea.vmem %s0, 368
    %v105 = vld [vmem:[%s104] sm:$0xff]
    %v106 = vsub.f32 %v103, %v105
    %v107 = vmul.f32 %v106, %v106
    %v108 = vadd.f32 %v101, %v107
    %s109 = scalar_lea.vmem %s0, 184
    %v110 = vld [vmem:[%s109] sm:$0xff]
    %s111 = scalar_lea.vmem %s0, 376
    %v112 = vld [vmem:[%s111] sm:$0xff]
    %v113 = vsub.f32 %v110, %v112
    %v114 = vmul.f32 %v113, %v113
    %v115 = vadd.f32 %v108, %v114
    %s116 = scalar_lea.vmem %s0, 192
    %v117 = vld [vmem:[%s116] sm:$0xff]
    %s118 = scalar_lea.vmem %s0, 384
    %v119 = vld [vmem:[%s118] sm:$0xff]
    %v120 = vsub.f32 %v117, %v119
    %v121 = vmul.f32 %v120, %v120
    %v122 = vadd.f32 %v115, %v121
    %s123 = scalar_lea.vmem %s0, 200
    %v124 = vld [vmem:[%s123] sm:$0xff]
    %s125 = scalar_lea.vmem %s0, 392
    %v126 = vld [vmem:[%s125] sm:$0xff]
    %v127 = vsub.f32 %v124, %v126
    %v128 = vmul.f32 %v127, %v127
    %v129 = vadd.f32 %v122, %v128
    %s130 = scalar_lea.vmem %s0, 208
    %v131 = vld [vmem:[%s130] sm:$0xff]
    %s132 = scalar_lea.vmem %s0, 400
    %v133 = vld [vmem:[%s132] sm:$0xff]
    %v134 = vsub.f32 %v131, %v133
    %v135 = vmul.f32 %v134, %v134
    %v136 = vadd.f32 %v129, %v135
    %s137 = scalar_lea.vmem %s0, 216
    %v138 = vld [vmem:[%s137] sm:$0xff]
    %s139 = scalar_lea.vmem %s0, 408
    %v140 = vld [vmem:[%s139] sm:$0xff]
    %v141 = vsub.f32 %v138, %v140
    %v142 = vmul.f32 %v141, %v141
    %v143 = vadd.f32 %v136, %v142
    %s144 = scalar_lea.vmem %s0, 224
    %v145 = vld [vmem:[%s144] sm:$0xff]
    %s146 = scalar_lea.vmem %s0, 416
    %v147 = vld [vmem:[%s146] sm:$0xff]
    %v148 = vsub.f32 %v145, %v147
    %v149 = vmul.f32 %v148, %v148
    %v150 = vadd.f32 %v143, %v149
    %s151 = scalar_lea.vmem %s0, 232
    %v152 = vld [vmem:[%s151] sm:$0xff]
    %s153 = scalar_lea.vmem %s0, 424
    %v154 = vld [vmem:[%s153] sm:$0xff]
    %v155 = vsub.f32 %v152, %v154
    %v156 = vmul.f32 %v155, %v155
    %v157 = vadd.f32 %v150, %v156
    %v158 = vld [vmem:[#allocation2] sm:$0xff]
    %v159 = vmul.f32 %v18, %v157
    %v160 = vadd.f32 %v158, %v159
    %161 = vst [vmem:[#allocation2] sm:$0xff] %v160
    %s162 = scalar_lea.vmem %s0, 32
    %v163 = vld [vmem:[%s162] sm:$0xff]
    %s164 = scalar_lea.vmem %s0, 72
    %v165 = vld [vmem:[%s164] sm:$0xff]
    %v166 = vld [vmem:[#allocation3] sm:$0xff]
    %v167 = vsub.f32 1.0, %v18
    %v168 = vmul.f32 %v163, %v163
    %v169 = vmul.f32 %v165, %v165
    %v170 = vadd.f32 %v168, %v169
    %v171 = vmul.f32 %v167, %v170
    %v172 = vadd.f32 %v166, %v171
    %173 = vst [vmem:[#allocation3] sm:$0xff] %v172
    %v174 = vld [vmem:[%s0] sm:$0xff]
    %s175 = scalar_lea.vmem %s0, 8
    %v176 = vld [vmem:[%s175] sm:$0xff]
    %s177 = scalar_lea.vmem %s0, 16
    %v178 = vld [vmem:[%s177] sm:$0xff]
    %s179 = scalar_lea.vmem %s0, 24
    %v180 = vld [vmem:[%s179] sm:$0xff]
    %s181 = scalar_lea.vmem %s0, 240
    %v182 = vld [vmem:[%s181] sm:$0xff]
    %s183 = scalar_lea.vmem %s0, 248
    %v184 = vld [vmem:[%s183] sm:$0xff]
    %s185 = scalar_lea.vmem %s0, 256
    %v186 = vld [vmem:[%s185] sm:$0xff]
    %s187 = scalar_lea.vmem %s0, 264
    %v188 = vld [vmem:[%s187] sm:$0xff]
    %v189 = vmul.f32 %v174, 0.125
    %v190 = vmul.f32 %v178, 0.5
    %v191 = vsub.f32 %v189, %v190
    %v192 = vmul.f32 %v176, 0.125
    %v193 = vmul.f32 %v180, 0.5
    %v194 = vsub.f32 %v192, %v193
    %v195 = vadd.f32 %v189, %v190
    %v196 = vadd.f32 %v192, %v193
    %v197 = vmul.f32 %v182, 0.125
    %v198 = vmul.f32 %v186, 0.5
    %v199 = vsub.f32 %v197, %v198
    %v200 = vmul.f32 %v184, 0.125
    %v201 = vmul.f32 %v188, 0.5
    %v202 = vsub.f32 %v200, %v201
    %v203 = vadd.f32 %v197, %v198
    %v204 = vadd.f32 %v200, %v201
    %v205 = vmin.f32 %v195, %v203
    %v206 = vmax.f32 %v191, %v199
    %v207 = vsub.f32 %v205, %v206
    %v208 = vmax.f32 %v207, 0.0
    %v209 = vmin.f32 %v196, %v204
    %v210 = vmax.f32 %v194, %v202
    %v211 = vsub.f32 %v209, %v210
    %v212 = vmax.f32 %v211, 0.0
    %v213 = vmul.f32 %v208, %v212
    %v214 = vsub.f32 %v195, %v191
    %v215 = vsub.f32 %v196, %v194
    %v216 = vmul.f32 %v214, %v215
    %v217 = vsub.f32 %v203, %v199
    %v218 = vsub.f32 %v204, %v202
    %v219 = vmul.f32 %v217, %v218
    %v220 = vadd.f32 %v216, %v219
    %v221 = vsub.f32 %v220, %v213
    %v222 = vmax.f32 %v221, 1e-12
    %v223 = vrcp.pop %v222
    %v224 = vmul.f32 %v213, %v223
    %s225 = scalar_lea.vmem %s0, 40
    %v226 = vld [vmem:[%s225] sm:$0xff]
    %s227 = scalar_lea.vmem %s0, 48
    %v228 = vld [vmem:[%s227] sm:$0xff]
    %v229 = vsub.f32 %v182, %v226
    %v230 = vsub.f32 %v184, %v228
    %v231 = vld [vmem:[#allocation4] sm:$0xff]
    %v232 = vmul.f32 %v229, %v229
    %v233 = vmul.f32 %v230, %v230
    %v234 = vadd.f32 %v232, %v233
    %v235 = vmul.f32 %v18, %v234
    %v236 = vadd.f32 %v231, %v235
    %237 = vst [vmem:[#allocation4] sm:$0xff] %v236
    %v238 = vsub.f32 %v165, %v224
    %v239 = vld [vmem:[#allocation5] sm:$0xff]
    %v240 = vmul.f32 %v238, %v238
    %v241 = vmul.f32 %v18, %v240
    %v242 = vadd.f32 %v239, %v241
    %243 = vst [vmem:[#allocation5] sm:$0xff] %v242
    // Predicated region
    $region10: #{yolo_loss.1} parent=1 // pred_check
      %p244 = pneg %p9
    $region11: #{yolo_loss.1} parent=1 // pred_check_branch
      %246 = sbr.rel (%p244) target = $region13
    $region12: #{yolo_loss.1} parent=1 // pred_region
      %v247 = vld [vmem:[#allocation2] sm:$0xff]
      %248 = vadd.xlane.f32.xlu0 %v247
      %v249 = vpop.xlane.xlu0 %248
      %v250 = vrot.slane %v249, 4
      %v251 = vadd.f32 %v249, %v250
      %v252 = vrot.slane %v251, 2
      %v253 = vadd.f32 %v251, %v252
      %v254 = vrot.slane %v253, 1
      %v255 = vadd.f32 %v253, %v254
      %s256 = vtos %v255
      %s257 = scalar_lea.smem [#allocation6], 0
      %258 = sst [smem:[%s257]] %s256
      %v259 = vld [vmem:[#allocation3] sm:$0xff]
      %260 = vadd.xlane.f32.xlu0 %v259
      %v261 = vpop.xlane.xlu0 %260
      %v262 = vrot.slane %v261, 4
      %v263 = vadd.f32 %v261, %v262
      %v264 = vrot.slane %v263, 2
      %v265 = vadd.f32 %v263, %v264
      %v266 = vrot.slane %v265, 1
      %v267 = vadd.f32 %v265, %v266
      %s268 = vtos %v267
      %s269 = scalar_lea.smem [#allocation6], 1
      %270 = sst [smem:[%s269]] %s268
      %v271 = vld [vmem:[#allocation4] sm:$0xff]
      %272 = vadd.xlane.f32.xlu0 %v271
      %v273 = vpop.xlane.xlu0 %272
      %v274 = vrot.slane %v273, 4
      %v275 = vadd.f32 %v273, %v274
      %v276 = vrot.slane %v275, 2
      %v277 = vadd.f32 %v275, %v276
      %v278 = vrot.slane %v277, 1
      %v279 = vadd.f32 %v277, %v278
      %s280 = vtos %v279
      %s281 = scalar_lea.smem [#allocation6], 2
      %282 = sst [smem:[%s281]] %s280
      %v283 = vld [vmem:[#allocation5] sm:$0xff]
      %284 = vadd.xlane.f32.xlu0 %v283
      %v285 = vpop.xlane.xlu0 %284
      %v286 = vrot.slane %v285, 4
      %v287 = vadd.f32 %v285, %v286
      %v288 = vrot.slane %v287, 2
      %v289 = vadd.f32 %v287, %v288
      %v290 = vrot.slane %v289, 1
      %v291 = vadd.f32 %v289, %v290
      %s292 = vtos %v291
      %s293 = scalar_lea.smem [#allocation6], 3
      %294 = sst [smem:[%s293]] %s292
    $region13: #{yolo_loss.1} parent=1 // pred_fallthru
      _
    // Predicated region
    $region14: #{yolo_loss.1} parent=1 // pred_check
      _
    $region15: #{yolo_loss.1} parent=1 // pred_check_branch
      %296 = sbr.rel (0) target = $region17
    $region16: #{yolo_loss.1} parent=1 // pred_region
      %s298 = ssub.s32 16, 16
      %299 = vsyncadd [#allocation7], %s298
      %s301 = sshll.u32 %s1, 4
      %s302 = int_to_ptr.vmem [resolvable:$true] %s301
      %304 = dma.smem_to_vmem [#allocation6], 16, %s302, [#allocation7]
    $region17: #{yolo_loss.1} parent=1 // pred_fallthru
      _
    // Predicated region
    $region18: #{yolo_loss.1} parent=1 // pred_check
      _
    $region19: #{yolo_loss.1} parent=1 // pred_check_branch
      %306 = sbr.rel (0) target = $region21
    $region20: #{yolo_loss.1} parent=1 // pred_region
      %307 = dma.done [#allocation7], 16
    $region21: #{yolo_loss.1} parent=1 // pred_fallthru
      _
    %308 = sfence
    %309 = vsyncpa [#allocation7], 1

</llo_original>
